<compile_context>
chip_gen: v7x
topology: tpu7x:2x2x1
jax: 0.10.0
libtpu: 0.0.40
codegen_flags: <defaults>
</compile_context>

<pallas_src>
import functools

import jax
import jax.numpy as jnp
from jax import lax
from jax.experimental import pallas as pl
from jax.experimental.pallas import tpu as pltpu


def _round_up(n, m):
    return ((n + m - 1) // m) * m


def _fused_mog_kernel(num_heads, num_gaussians, output_dim,
                      x_ref, w_ref, b_ref, out_ref):
    """One fused matmul (fc folded into heads) + softmax/exp epilogue."""
    H, G, D = num_heads, num_gaussians, output_dim
    HG = H * G
    HGD = H * G * D

    x = x_ref[...]
    # Single MXU matmul producing all heads at once: (TB, HG + 2*HGD).
    y = jnp.dot(x, w_ref[...], preferred_element_type=jnp.float32) + b_ref[...]

    pi_lin = y[:, :HG]
    sg_lin = y[:, HG:HG + HGD]
    mu_lin = y[:, HG + HGD:]

    # --- pi: per-head softmax over the gaussian axis (vectorized) ---
    # A single per-row max is a constant shift inside every head segment, so
    # the per-head softmax result is unchanged (no segmented max needed).
    m = jnp.max(pi_lin, axis=-1, keepdims=True)
    e = jnp.exp(pi_lin - m)
    if H == 1:
        denom = jnp.sum(e, axis=-1, keepdims=True)
    else:
        # Segmented (per-head) sums in one tiny block-diagonal-ones matmul.
        row_seg = lax.broadcasted_iota(jnp.int32, (HG, HG), 0) // G
        col_seg = lax.broadcasted_iota(jnp.int32, (HG, HG), 1) // G
        seg_ones = (row_seg == col_seg).astype(jnp.float32)
        denom = jnp.dot(e, seg_ones, preferred_element_type=jnp.float32)
    pi = e / denom

    # --- sigma: exp(.) is strictly positive, so ELU is the identity here ---
    sigma = jnp.exp(sg_lin) + 1e-15

    # Single lane-dense output slab [pi | sigma | mu]; the output tile lives in
    # VMEM and is written back to HBM with one DMA. (Static-offset slice
    # stores into the resident VMEM tile — cheap, no extra output DMAs.)
    out_ref[:, :HG] = pi
    out_ref[:, HG:HG + HGD] = sigma
    out_ref[:, HG + HGD:] = mu_lin


def contrastive_mog_multihead_forward(x_tuple, params, *, num_heads,
                                       num_gaussians, output_dim,
                                       block_b=512):
    """Mirrors the PyTorch forward: x = (positive_out, negative_out, t_pos, t_neg)."""
    positive_out, negative_out, _last_pos_ts, _last_neg_ts = x_tuple
    x = jnp.concatenate([positive_out, negative_out], axis=-1).astype(jnp.float32)
    B, input_dim = x.shape

    H, G, D = num_heads, num_gaussians, output_dim
    HG = H * G
    HGD = H * G * D
    Ntot = HG + 2 * HGD

    # Fold fc into the heads (valid while dropout is identity / eval mode).
    w_heads = jnp.concatenate(
        [params["w_pi"], params["w_sigma"], params["w_mu"]], axis=1)
    b_heads = jnp.concatenate(
        [params["b_pi"], params["b_sigma"], params["b_mu"]], axis=0)
    w_fused = params["w_fc"] @ w_heads                     # (input_dim, Ntot)
    b_fused = (params["b_fc"] @ w_heads + b_heads)[None, :]  # (1, Ntot)

    tb = min(block_b, _round_up(B, 8))
    nb = pl.cdiv(B, tb)

    kernel = functools.partial(_fused_mog_kernel, H, G, D)

    out = pl.pallas_call(
        kernel,
        out_shape=jax.ShapeDtypeStruct((B, Ntot), jnp.float32),
        grid=(nb,),
        in_specs=[
            pl.BlockSpec((tb, input_dim), lambda i: (i, 0)),     # x: batch-tiled
            pl.BlockSpec((input_dim, Ntot), lambda i: (0, 0)),   # fused weights (resident)
            pl.BlockSpec((1, Ntot), lambda i: (0, 0)),           # fused bias (resident)
        ],
        out_specs=pl.BlockSpec((tb, Ntot), lambda i: (i, 0)),
        compiler_params=pltpu.CompilerParams(
            dimension_semantics=("parallel",),
        ),
    )(x, w_fused, b_fused)

    pi = out[:, :HG].reshape(B, H, G)
    sigma = out[:, HG:HG + HGD].reshape(B, H, G, D)
    mu = out[:, HG + HGD:].reshape(B, H, G, D)
    return pi, mu, sigma


def init_params(key, input_dim, output_dim, num_gaussians, num_heads, hidden=32):
    """Deterministic init mirroring the module's layer shapes.

    Weights are stored as (in_features, out_features) — i.e. PyTorch weight^T.
    """
    k = jax.random.split(key, 8)
    HG = num_gaussians * num_heads
    HGD = output_dim * num_gaussians * num_heads

    def xavier_uniform(key, fan_in, fan_out):
        limit = jnp.sqrt(6.0 / (fan_in + fan_out))
        return jax.random.uniform(key, (fan_in, fan_out), jnp.float32, -limit, limit)

    def xavier_normal(key, fan_in, fan_out):
        std = jnp.sqrt(2.0 / (fan_in + fan_out))
        return jax.random.normal(key, (fan_in, fan_out), jnp.float32) * std

    def default_linear(key, fan_in, fan_out):
        limit = 1.0 / jnp.sqrt(fan_in)
        return jax.random.uniform(key, (fan_in, fan_out), jnp.float32, -limit, limit)

    return {
        "w_fc": default_linear(k[0], input_dim, hidden),
        "b_fc": jax.random.uniform(k[1], (hidden,), jnp.float32,
                                   -1.0 / jnp.sqrt(input_dim), 1.0 / jnp.sqrt(input_dim)),
        "w_pi": xavier_uniform(k[2], hidden, HG),
        "b_pi": jnp.zeros((HG,), jnp.float32),
        "w_sigma": xavier_normal(k[3], hidden, HGD),
        "b_sigma": jnp.zeros((HGD,), jnp.float32),
        "w_mu": xavier_normal(k[4], hidden, HGD),
        "b_mu": jnp.zeros((HGD,), jnp.float32),
    }


def _reference_forward(x_tuple, params, *, num_heads, num_gaussians, output_dim):
    """Pure-JAX reference mirroring the PyTorch forward (eval-mode dropout)."""
    positive_out, negative_out, _, _ = x_tuple
    x = jnp.concatenate([positive_out, negative_out], axis=-1)
    B = x.shape[0]
    h = x @ params["w_fc"] + params["b_fc"]
    pi = (h @ params["w_pi"] + params["b_pi"]).reshape(B, num_heads, num_gaussians)
    pi = jax.nn.softmax(pi, axis=2)
    sigma = jnp.exp(h @ params["w_sigma"] + params["b_sigma"]).reshape(
        B, num_heads, num_gaussians, output_dim)
    mu = (h @ params["w_mu"] + params["b_mu"]).reshape(
        B, num_heads, num_gaussians, output_dim)
    sigma = jnp.where(sigma > 0, sigma, jnp.exp(sigma) - 1.0) + 1e-15
    return pi, mu, sigma


if __name__ == "__main__":
    B = 8
    POS_DIM = 8
    NEG_DIM = 8
    INPUT_DIM = POS_DIM + NEG_DIM   # fc input dim (after concat)
    OUTPUT_DIM = 2
    NUM_GAUSSIANS = 2

    key = jax.random.PRNGKey(0)
    kpos, kneg, kp1, kp2 = jax.random.split(key, 4)
    positive_out = jax.random.normal(kpos, (B, POS_DIM), jnp.float32)
    negative_out = jax.random.normal(kneg, (B, NEG_DIM), jnp.float32)
    x_tuple = (positive_out, negative_out, -1, -1)

    all_ok = True
    for num_heads, kp in ((1, kp1), (2, kp2)):
        params = init_params(kp, INPUT_DIM, OUTPUT_DIM, NUM_GAUSSIANS, num_heads)

        pi, mu, sigma = contrastive_mog_multihead_forward(
            x_tuple, params,
            num_heads=num_heads, num_gaussians=NUM_GAUSSIANS, output_dim=OUTPUT_DIM)
        jax.block_until_ready((pi, mu, sigma))

        pi_r, mu_r, sigma_r = _reference_forward(
            x_tuple, params,
            num_heads=num_heads, num_gaussians=NUM_GAUSSIANS, output_dim=OUTPUT_DIM)

        assert pi.shape == (B, num_heads, NUM_GAUSSIANS)
        assert mu.shape == (B, num_heads, NUM_GAUSSIANS, OUTPUT_DIM)
        assert sigma.shape == (B, num_heads, NUM_GAUSSIANS, OUTPUT_DIM)
        all_ok &= bool(jnp.allclose(pi, pi_r, atol=1e-4, rtol=1e-4))
        all_ok &= bool(jnp.allclose(mu, mu_r, atol=1e-4, rtol=1e-4))
        all_ok &= bool(jnp.allclose(sigma, sigma_r, atol=1e-4, rtol=1e-4))

    assert all_ok
    print("KERNEL_OK")
</pallas_src>

<mosaic_0001>
module attributes {stable_mosaic.version = 11 : i64} {
  func.func @_fused_mog_kernel(%arg0: i32, %arg1: memref<8x16xf32, #tpu.memory_space<vmem>>, %arg2: memref<16x10xf32, #tpu.memory_space<vmem>>, %arg3: memref<1x10xf32, #tpu.memory_space<vmem>>, %arg4: memref<8x10xf32, #tpu.memory_space<vmem>>) attributes {dimension_semantics = [#tpu.dimension_semantics<parallel>], iteration_bounds = array<i64: 1>, scalar_prefetch = 0 : i64, scratch_operands = 0 : i64, tpu.core_type = #tpu.core_type<tc>, window_params = [{transform_indices = @transform_0, window_bounds = array<i64: 8, 16>}, {pipeline_mode = #tpu.pipeline_mode<synchronous>, transform_indices = @transform_1, window_bounds = array<i64: 16, 10>}, {pipeline_mode = #tpu.pipeline_mode<synchronous>, transform_indices = @transform_2, window_bounds = array<i64: 1, 10>}, {transform_indices = @transform_3, window_bounds = array<i64: 8, 10>}]} {
    %c0 = arith.constant 0 : index
    %c0_0 = arith.constant 0 : index
    %0 = vector.load %arg1[%c0, %c0_0] : memref<8x16xf32, #tpu.memory_space<vmem>>, vector<8x16xf32>
    %c0_1 = arith.constant 0 : index
    %c0_2 = arith.constant 0 : index
    %1 = vector.load %arg2[%c0_1, %c0_2] : memref<16x10xf32, #tpu.memory_space<vmem>>, vector<16x10xf32>
    %cst = arith.constant dense<0.000000e+00> : vector<8x10xf32>
    %2 = tpu.matmul %0, %1, %cst {dimension_numbers = #tpu.dot_dimension_numbers<[1], [0], [0], [1], [0, 0, 1, 1], [], []>} : vector<8x16xf32>, vector<16x10xf32>, vector<8x10xf32> -> vector<8x10xf32>
    %c0_3 = arith.constant 0 : index
    %c0_4 = arith.constant 0 : index
    %3 = vector.load %arg3[%c0_3, %c0_4] : memref<1x10xf32, #tpu.memory_space<vmem>>, vector<1x10xf32>
    %4 = vector.broadcast %3 : vector<1x10xf32> to vector<8x10xf32>
    %5 = arith.addf %2, %4 : vector<8x10xf32>
    %6 = vector.extract_strided_slice %5 {offsets = [0, 0], sizes = [8, 2], strides = [1, 1]} : vector<8x10xf32> to vector<8x2xf32>
    %7 = vector.extract_strided_slice %5 {offsets = [0, 2], sizes = [8, 4], strides = [1, 1]} : vector<8x10xf32> to vector<8x4xf32>
    %8 = vector.extract_strided_slice %5 {offsets = [0, 6], sizes = [8, 4], strides = [1, 1]} : vector<8x10xf32> to vector<8x4xf32>
    %cst_5 = arith.constant dense<0xFF800000> : vector<8xf32>
    %9 = vector.multi_reduction <maximumf>, %6, %cst_5 [1] : vector<8x2xf32> to vector<8xf32>
    %10 = vector.shape_cast %9 : vector<8xf32> to vector<8x1xf32>
    %11 = vector.broadcast %10 : vector<8x1xf32> to vector<8x2xf32>
    %12 = arith.subf %6, %11 : vector<8x2xf32>
    %13 = math.exp %12 : vector<8x2xf32>
    %cst_6 = arith.constant dense<0.000000e+00> : vector<8xf32>
    %14 = vector.multi_reduction <add>, %13, %cst_6 [1] : vector<8x2xf32> to vector<8xf32>
    %15 = vector.shape_cast %14 : vector<8xf32> to vector<8x1xf32>
    %16 = vector.broadcast %15 : vector<8x1xf32> to vector<8x2xf32>
    %17 = arith.divf %13, %16 : vector<8x2xf32>
    %18 = math.exp %7 : vector<8x4xf32>
    %cst_7 = arith.constant 1.000000e-15 : f32
    %19 = vector.broadcast %cst_7 : f32 to vector<8x4xf32>
    %20 = arith.addf %18, %19 : vector<8x4xf32>
    %c0_8 = arith.constant 0 : index
    %c0_9 = arith.constant 0 : index
    %21 = vector.load %arg4[%c0_8, %c0_9] : memref<8x10xf32, #tpu.memory_space<vmem>>, vector<8x2xf32>
    tpu.vector_store %arg4[%c0_8, %c0_9], %17 {strides = array<i32>} : memref<8x10xf32, #tpu.memory_space<vmem>>, vector<8x2xf32>,
    %c0_10 = arith.constant 0 : index
    %c2 = arith.constant 2 : index
    %22 = vector.load %arg4[%c0_10, %c2] : memref<8x10xf32, #tpu.memory_space<vmem>>, vector<8x4xf32>
    tpu.vector_store %arg4[%c0_10, %c2], %20 {strides = array<i32>} : memref<8x10xf32, #tpu.memory_space<vmem>>, vector<8x4xf32>,
    %c0_11 = arith.constant 0 : index
    %c6 = arith.constant 6 : index
    %23 = vector.load %arg4[%c0_11, %c6] : memref<8x10xf32, #tpu.memory_space<vmem>>, vector<8x4xf32>
    tpu.vector_store %arg4[%c0_11, %c6], %8 {strides = array<i32>} : memref<8x10xf32, #tpu.memory_space<vmem>>, vector<8x4xf32>,
    return
  }
  func.func @transform_0(%arg0: i32) -> (i32, i32) {
    %c0_i32 = arith.constant 0 : i32
    %c0_i32_0 = arith.constant 0 : i32
    return %arg0, %c0_i32 : i32, i32
  }
  func.func @transform_1(%arg0: i32) -> (i32, i32) {
    %c0_i32 = arith.constant 0 : i32
    %c0_i32_0 = arith.constant 0 : i32
    %c0_i32_1 = arith.constant 0 : i32
    return %c0_i32, %c0_i32_0 : i32, i32
  }
  func.func @transform_2(%arg0: i32) -> (i32, i32) {
    %c0_i32 = arith.constant 0 : i32
    %c0_i32_0 = arith.constant 0 : i32
    %c0_i32_1 = arith.constant 0 : i32
    return %c0_i32, %c0_i32_0 : i32, i32
  }
  func.func @transform_3(%arg0: i32) -> (i32, i32) {
    %c0_i32 = arith.constant 0 : i32
    %c0_i32_0 = arith.constant 0 : i32
    return %arg0, %c0_i32 : i32, i32
  }
}

</mosaic_0001>

<llo_original>
// kernel: tpu_custom_call.1
$region0: #{tpu_custom_call.1}
  #allocation0 [shape = 'u32[]', space=smem, size = 0x4, offset = 0x4, fixed_abs, tag = 'smem constant byte address 0x4 - core index']
  #allocation1 [shape = 'u32[144,128]{1,0:T(1,128)}', space=vmem, size = 0x12000, scoped, tag = 'internal scratch']
  %s0 = inlined_call_operand.hbm [shape: f32[8,16], index: 0, kind: input, shape index: {}]
  %s1 = inlined_call_operand.hbm [shape: f32[16,10], index: 1, kind: input, shape index: {}]
  %s2 = inlined_call_operand.vmem [shape: f32[1,10], index: 2, kind: input, shape index: {}]
  %s3 = inlined_call_operand.hbm [shape: f32[8,10], index: 3, kind: output, shape index: {}]
  %s4 = sld [smem:[#allocation0]]
  $region30: #{tpu_custom_call.1} parent=0
    _
  %s6 = ssub.s32 1, %s4
  %s7 = scalar_select 0, %s6, %s4
  $region1: #{tpu_custom_call.1} parent=0
    #allocation2 [shape = 'u8[4096]{0}', space=vmem, size = 0x1000, scoped, tag = 'input window, operand 0, single buffered']
    #allocation3 [shape = 's32[1]{0}', space=sflag, size = 0x4, scoped, tag = 'scoped memory for tpu_custom_call.1']
    #allocation4 [shape = 's32[1]{0}', space=sflag, size = 0x4, scoped, tag = 'scoped memory for tpu_custom_call.1']
    #allocation5 [shape = 'u8[8192]{0}', space=vmem, size = 0x2000, scoped, tag = 'input window, operand 1, single buffered']
    #allocation6 [shape = 's32[1]{0}', space=sflag, size = 0x4, scoped, tag = 'scoped memory for tpu_custom_call.1']
    #allocation7 [shape = 'u8[4096]{0}', space=vmem, size = 0x1000, scoped, tag = 'output window, operand 0, single buffered']
    %8 = vsyncpa [#allocation3], 0
    %9 = vsyncpa [#allocation6], 0
    %10 = vsyncpa [#allocation4], 0
    // Predicated region
    $region2: #{tpu_custom_call.1} parent=1 // pred_check
      _
    $region3: #{tpu_custom_call.1} parent=1 // pred_check_branch
      %12 = sbr.rel (0) target = $region5
    $region4: #{tpu_custom_call.1} parent=1 // pred_region
      %s14 = ssub.s32 128, 128
      %15 = vsyncadd [#allocation3], %s14
      %s17 = sshll.u32 [#allocation2], 4
      %s18 = int_to_ptr.vmem [resolvable:$true] %s17
      %20 = dma.hbm_to_vmem [thread:$0]  %s0, 128, %s18, [#allocation3]
    $region5: #{tpu_custom_call.1} parent=1 // pred_fallthru
      _
    // Predicated region
    $region6: #{tpu_custom_call.1} parent=1 // pred_check
      _
    $region7: #{tpu_custom_call.1} parent=1 // pred_check_branch
      %22 = sbr.rel (0) target = $region9
    $region8: #{tpu_custom_call.1} parent=1 // pred_region
      %s24 = ssub.s32 256, 256
      %25 = vsyncadd [#allocation6], %s24
      %s26 = sshll.u32 [#allocation5], 4
      %s27 = int_to_ptr.vmem [resolvable:$true] %s26
      %32 = dma.hbm_to_vmem [thread:$0]  %s1, 256, %s27, [#allocation6], 128, 128, 8
    $region9: #{tpu_custom_call.1} parent=1 // pred_fallthru
      _
    // Predicated region
    $region10: #{tpu_custom_call.1} parent=1 // pred_check
      _
    $region11: #{tpu_custom_call.1} parent=1 // pred_check_branch
      %34 = sbr.rel (0) target = $region13
    $region12: #{tpu_custom_call.1} parent=1 // pred_region
      _
    $region13: #{tpu_custom_call.1} parent=1 // pred_fallthru
      _
    // Predicated region
    $region14: #{tpu_custom_call.1} parent=1 // pred_check
      _
    $region15: #{tpu_custom_call.1} parent=1 // pred_check_branch
      %36 = sbr.rel (0) target = $region17
    $region16: #{tpu_custom_call.1} parent=1 // pred_region
      %37 = dma.done [#allocation3], 128
    $region17: #{tpu_custom_call.1} parent=1 // pred_fallthru
      _
    // Predicated region
    $region18: #{tpu_custom_call.1} parent=1 // pred_check
      _
    $region19: #{tpu_custom_call.1} parent=1 // pred_check_branch
      %39 = sbr.rel (0) target = $region21
    $region20: #{tpu_custom_call.1} parent=1 // pred_region
      %40 = dma.done [#allocation6], 256
    $region21: #{tpu_custom_call.1} parent=1 // pred_fallthru
      _
    %v41 = vld [vmem:[#allocation2] sm:$0xff]
    %v42 = vld [vmem:[#allocation5] sm:$0xff]
    %v43 = vld [vmem:[#allocation5 + $0x8] sm:$0xff]
    %v44 = vld [vmem:[%s2] sm:$0x1]
    %v46 = vlaneseq
    %v47 = vshrl.u32 %v46, 7
    %v48 = vsub.s32 0, %v47
    %v49 = vrot.slane %v44, %v48
    %vm51 = vcmask 130048
    %v53 = vsel %vm51, %v41, 0
    %55 = vmatprep.subr.mxu0 0.0
    %56 = vmatpush1.msra.mxu0 %v42
    %57 = vmatprep.subr.mxu0 0.0
    %58 = vmatpush1.msra.mxu0 %v43
    %59 = vmatprep.subr.mxu0 0.0
    %60 = vmatpush1.msra.mxu0 0.0
    %61 = vmatprep.subr.mxu0 0.0
    %62 = vmatpush1.msra.mxu0 0.0
    %63 = vmatprep.subr.mxu0 0.0
    %64 = vmatpush1.msra.mxu0 0.0
    %65 = vmatprep.subr.mxu0 0.0
    %66 = vmatpush1.msra.mxu0 0.0
    %67 = vmatprep.subr.mxu0 0.0
    %68 = vmatpush1.msra.mxu0 0.0
    %69 = vmatprep.subr.mxu0 0.0
    %70 = vmatpush1.msra.mxu0 0.0
    %71 = vmatprep.subr.mxu0 0.0
    %72 = vmatpush1.msra.mxu0 0.0
    %73 = vmatprep.subr.mxu0 0.0
    %74 = vmatpush1.msra.mxu0 0.0
    %75 = vmatprep.subr.mxu0 0.0
    %76 = vmatpush1.msra.mxu0 0.0
    %77 = vmatprep.subr.mxu0 0.0
    %78 = vmatpush1.msra.mxu0 0.0
    %79 = vmatprep.subr.mxu0 0.0
    %80 = vmatpush1.msra.mxu0 0.0
    %81 = vmatprep.subr.mxu0 0.0
    %82 = vmatpush1.msra.mxu0 0.0
    %83 = vmatprep.subr.mxu0 0.0
    %84 = vmatpush1.msra.mxu0 0.0
    %85 = vmatprep.subr.mxu0 0.0
    %86 = vmatpush1.msra.mxu0 0.0
    %87 = vmatprep.subr.mxu0 0.0
    %88 = vmatpush1.msra.mxu0 0.0
    %89 = vmatprep.subr.mxu0 0.0
    %90 = vmatpush1.msra.mxu0 0.0
    %91 = vmatprep.subr.mxu0 0.0
    %92 = vmatpush1.msra.mxu0 0.0
    %93 = vmatprep.subr.mxu0 0.0
    %94 = vmatpush1.msra.mxu0 0.0
    %95 = vmatprep.subr.mxu0 0.0
    %96 = vmatpush1.msra.mxu0 0.0
    %97 = vmatprep.subr.mxu0 0.0
    %98 = vmatpush1.msra.mxu0 0.0
    %99 = vmatprep.subr.mxu0 0.0
    %100 = vmatpush1.msra.mxu0 0.0
    %101 = vmatprep.subr.mxu0 0.0
    %102 = vmatpush1.msra.mxu0 0.0
    %103 = vmatprep.subr.mxu0 0.0
    %104 = vmatpush1.msra.mxu0 0.0
    %105 = vmatprep.subr.mxu0 0.0
    %106 = vmatpush1.msra.mxu0 0.0
    %107 = vmatprep.subr.mxu0 0.0
    %108 = vmatpush1.msra.mxu0 0.0
    %109 = vmatprep.subr.mxu0 0.0
    %110 = vmatpush1.msra.mxu0 0.0
    %111 = vmatprep.subr.mxu0 0.0
    %112 = vmatpush1.msra.mxu0 0.0
    %113 = vmatprep.subr.mxu0 0.0
    %114 = vmatpush1.msra.mxu0 0.0
    %115 = vmatprep.subr.mxu0 0.0
    %116 = vmatpush1.msra.mxu0 0.0
    %117 = vmatprep.subr.mxu0 0.0
    %118 = vmatpush1.msra.mxu0 0.0
    %119 = vmatprep.mubr.f32.mxu0 0.0
    %120 = vmatmul.mubr.f32.gmra.mrb[0].mxu0 %v53
    %v121 = vpop.f32.mrb[0].mxu0
    %v122 = vadd.f32 %v49, %v121
    %v123 = vpop.f32.mrb[0].mxu0
    %124 = vdwg.mxu0
    %vm125 = vcmask 15360
    %v126 = vsel %vm125, %v122, -inf
    %127 = vmax.xlane.f32.xlu0 %v126
    %v128 = vpop.xlane.xlu0 %127
    %v129 = vsub.f32 %v122, %v128
    %v130 = vmul.f32 %v129, 1.442695
    %v131 = vpow.pop %v130
    %v132 = vsel %vm125, %v131, 0.0
    %133 = vadd.xlane.f32.xlu0 %v132
    %v134 = vpop.xlane.xlu0 %133
    %v135 = vrcp.pop %v134
    %v136 = vmul.f32 %v131, %v135
    %v137 = vmul.f32 %v122, 1.442695
    %v138 = vpow.pop %v137
    %v139 = vadd.f32 %v138, 1e-15
    %140 = vst.msk [vmem:[#allocation7] sm:$0xff] %vm125, %v136
    %vm141 = vcmask 48144
    %142 = vst.msk [vmem:[#allocation7] sm:$0xff] %vm141, %v139
    %vm143 = vcmask 80944
    %144 = vst.msk [vmem:[#allocation7] sm:$0xff] %vm143, %v122
    // Predicated region
    $region22: #{tpu_custom_call.1} parent=1 // pred_check
      _
    $region23: #{tpu_custom_call.1} parent=1 // pred_check_branch
      %146 = sbr.rel (0) target = $region25
    $region24: #{tpu_custom_call.1} parent=1 // pred_region
      %s148 = ssub.s32 128, 128
      %149 = vsyncadd [#allocation4], %s148
      %s151 = sshll.u32 [#allocation7], 4
      %s152 = int_to_ptr.vmem [resolvable:$true] %s151
      %154 = dma.vmem_to_hbm [thread:$0]  %s152, 128, %s3, [#allocation4]
    $region25: #{tpu_custom_call.1} parent=1 // pred_fallthru
      _
    // Predicated region
    $region26: #{tpu_custom_call.1} parent=1 // pred_check
      _
    $region27: #{tpu_custom_call.1} parent=1 // pred_check_branch
      %156 = sbr.rel (0) target = $region29
    $region28: #{tpu_custom_call.1} parent=1 // pred_region
      %157 = dma.done [#allocation4], 128
    $region29: #{tpu_custom_call.1} parent=1 // pred_fallthru
      _
    %158 = vsyncpa [#allocation3], 1
    %159 = vsyncpa [#allocation6], 1
    %160 = vsyncpa [#allocation4], 1

</llo_original>
